<compile_context>
chip_gen: v6e
topology: v6e:2x2x1
jax: 0.10.0
libtpu: 0.0.40
codegen_flags: <defaults>
</compile_context>

<pallas_src>
import numpy as np
import jax
import jax.numpy as jnp
from jax.experimental import pallas as pl
from jax.experimental.pallas import tpu as pltpu

# ----------------------------- problem sizes -------------------------------
B_SAMPLES = 8    # batch of states (sample_nums)
N_OBJ     = 4    # objects per state
N_PROP    = 6    # properties per object
N_COMBS   = 16   # number of oppm combinations (len(self.oppm_combs))
N_PREDS   = 4    # number of predicates (len(all_predicates))
P_SPACE   = 8    # parameter grid size per predicate (smp_utils.get_param_range)

LANES = N_COMBS * B_SAMPLES          # 128 : lane-dense flattened (comb, sample)
FEAT  = B_SAMPLES * N_OBJ * N_PROP   # 192 : flattened state batch


# ------------------------------- kernel ------------------------------------
def oppm_eval_kernel(off_ref, maxth_ref, x_ref, w_ref, exp_ref, out_ref):
    """Evaluate all micro-program combinations against all samples.

    off_ref   : SMEM [N_PREDS]          f32  predicate offsets
    maxth_ref : SMEM [N_PREDS]          f32  max of each predicate's param grid
    x_ref     : VMEM [1, FEAT]          f32  flattened batch of states
    w_ref     : VMEM [FEAT, LANES]      f32  static gather/difference matrix
    exp_ref   : VMEM [N_PREDS, LANES]   f32  expected truth, broadcast over batch
    out_ref   : VMEM [1, LANES]         f32  satisfaction, lane l = comb*B + sample
    """
    # Fused gather+transpose: diff[0, c*B+b] = x[b, oi[c], p[c]] - x[b, oj[c], p[c]]
    diff = jnp.dot(x_ref[...], w_ref[...],
                   preferred_element_type=jnp.float32)          # [1, LANES]
    expb = exp_ref[...] > 0.5                                   # bool [NP, LANES]

    mismatch = None
    for k in range(N_PREDS):                                    # small static unroll
        # exists theta in p_space_k: |d - off_k| <= theta  <=>  |d - off_k| <= max(p_space_k)
        pred = jnp.abs(diff - off_ref[k]) <= maxth_ref[k]       # bool [1, LANES]
        mis_k = jnp.logical_xor(pred, expb[k:k + 1, :])         # True where pred != expected
        mismatch = mis_k if mismatch is None else jnp.logical_or(mismatch, mis_k)

    out_ref[...] = jnp.where(mismatch, jnp.float32(0.0), jnp.float32(1.0))


def oppm_eval_pallas(off, max_theta, x_flat, w, exp_flat):
    return pl.pallas_call(
        oppm_eval_kernel,
        out_shape=jax.ShapeDtypeStruct((1, LANES), jnp.float32),
        in_specs=[
            pl.BlockSpec(memory_space=pltpu.MemorySpace.SMEM),   # off
            pl.BlockSpec(memory_space=pltpu.MemorySpace.SMEM),   # max_theta
            pl.BlockSpec(memory_space=pltpu.MemorySpace.VMEM),   # x_flat
            pl.BlockSpec(memory_space=pltpu.MemorySpace.VMEM),   # w (gather matrix)
            pl.BlockSpec(memory_space=pltpu.MemorySpace.VMEM),   # expected (lane layout)
        ],
        out_specs=pl.BlockSpec(memory_space=pltpu.MemorySpace.VMEM),
    )(off, max_theta, x_flat, w, exp_flat)


# ---------------------------- module wrapper --------------------------------
class UngroundedMicroProgramPallas:
    """Deterministic synthetic instantiation of UngroundedMicroProgram."""

    def __init__(self):
        # oppm_combs: (obj_i, obj_j, prop) per combination -- deterministic.
        c = np.arange(N_COMBS)
        self.obj_i = (c % N_OBJ).astype(np.int32)
        self.obj_j = ((c + 1) % N_OBJ).astype(np.int32)
        self.prop = (c % N_PROP).astype(np.int32)

        # expected per-predicate satisfaction pattern (p_satisfactions), {0,1}
        expected_np = ((c[:, None] + np.arange(N_PREDS)[None, :]) % 2
                       ).astype(np.float32)                        # [C, NP]
        self.expected = jnp.asarray(expected_np)

        # p_spaces: parameter grid per predicate (get_param_range min..max)
        theta_np = (0.25 * (1.0 + np.arange(P_SPACE, dtype=np.float32)))[None, :] \
                   * (1.0 + np.arange(N_PREDS, dtype=np.float32))[:, None]
        self.theta = jnp.asarray(theta_np, jnp.float32)            # [NP, PS]
        self.max_theta = jnp.asarray(theta_np.max(axis=1), jnp.float32)  # [NP]

        # predicate offsets (synthetic predicate parameterization)
        self.off = jnp.asarray(0.5 * np.arange(N_PREDS, dtype=np.float32))  # [NP]

        # Static gather/difference matrix: folds the object/property gather,
        # the transpose, and the lane flattening into one constant.
        #   diff_flat[c*B + b] = x_flat[b*O*P + oi[c]*P + p[c]]
        #                      - x_flat[b*O*P + oj[c]*P + p[c]]
        w = np.zeros((FEAT, LANES), np.float32)
        for cc in range(N_COMBS):
            ii = int(self.obj_i[cc]) * N_PROP + int(self.prop[cc])
            jj = int(self.obj_j[cc]) * N_PROP + int(self.prop[cc])
            for b in range(B_SAMPLES):
                col = cc * B_SAMPLES + b
                w[b * N_OBJ * N_PROP + ii, col] += 1.0
                w[b * N_OBJ * N_PROP + jj, col] -= 1.0
        self.w = jnp.asarray(w)                                    # [FEAT, LANES]

        # expected pattern pre-broadcast to the lane layout:
        #   exp_flat[k, c*B + b] = expected[c, k]
        self.exp_flat = jnp.asarray(
            np.repeat(expected_np.T, B_SAMPLES, axis=1))           # [NP, LANES]

    def __call__(self, x):
        # Contiguous reshape only (free); gather happens inside the kernel.
        x_flat = x.reshape(1, FEAT).astype(jnp.float32)
        out = oppm_eval_pallas(self.off, self.max_theta, x_flat,
                               self.w, self.exp_flat)              # [1, LANES]
        return out.reshape(N_COMBS, B_SAMPLES)                     # lane l = c*B + b


# ------------------------------ reference -----------------------------------
def reference_eval(theta, off, diff, exp):
    """Pure-JAX reference of the original (existential p_space) semantics."""
    adiff = jnp.abs(diff[None, :, :] - off[:, None, None])          # [NP,C,B]
    within = adiff[..., None] <= theta[:, None, None, :]            # [NP,C,B,PS]
    pred_val = jnp.any(within, axis=-1).astype(jnp.float32)         # [NP,C,B]
    e = exp.T[:, :, None]                                           # [NP,C,1]
    match = e * pred_val + (1.0 - e) * (1.0 - pred_val)
    return jnp.prod(match, axis=0)                                  # [C,B]


if __name__ == "__main__":
    key = jax.random.PRNGKey(0)
    x = jax.random.normal(key, (B_SAMPLES, N_OBJ, N_PROP), dtype=jnp.float32)

    prog = UngroundedMicroProgramPallas()
    sat = prog(x)
    sat = jax.block_until_ready(sat)

    # sanity check against the pure-JAX reference (original existential form)
    a = x[:, prog.obj_i, prog.prop]                                 # [B, C]
    b = x[:, prog.obj_j, prog.prop]                                 # [B, C]
    diff = (a - b).T.astype(jnp.float32)                            # [C, B]
    ref = reference_eval(prog.theta, prog.off, diff, prog.expected)

    assert sat.shape == (N_COMBS, B_SAMPLES)
    assert bool(jnp.all(jnp.abs(sat - ref) < 1e-6))

    print("KERNEL_OK")
</pallas_src>

<mosaic_0001>
module attributes {stable_mosaic.version = 11 : i64} {
  func.func @oppm_eval_kernel(%arg0: memref<4xf32, #tpu.memory_space<smem>>, %arg1: memref<4xf32, #tpu.memory_space<smem>>, %arg2: memref<1x192xf32, #tpu.memory_space<vmem>>, %arg3: memref<192x128xf32, #tpu.memory_space<vmem>>, %arg4: memref<4x128xf32, #tpu.memory_space<vmem>>, %arg5: memref<1x128xf32, #tpu.memory_space<vmem>>) attributes {dimension_semantics = [], scalar_prefetch = 0 : i64, scratch_operands = 0 : i64, tpu.core_type = #tpu.core_type<tc>} {
    %c0 = arith.constant 0 : index
    %c0_0 = arith.constant 0 : index
    %0 = vector.load %arg2[%c0, %c0_0] : memref<1x192xf32, #tpu.memory_space<vmem>>, vector<1x192xf32>
    %c0_1 = arith.constant 0 : index
    %c0_2 = arith.constant 0 : index
    %1 = vector.load %arg3[%c0_1, %c0_2] : memref<192x128xf32, #tpu.memory_space<vmem>>, vector<192x128xf32>
    %cst = arith.constant dense<0.000000e+00> : vector<1x128xf32>
    %2 = tpu.matmul %0, %1, %cst {dimension_numbers = #tpu.dot_dimension_numbers<[1], [0], [0], [1], [0, 0, 1, 1], [], []>} : vector<1x192xf32>, vector<192x128xf32>, vector<1x128xf32> -> vector<1x128xf32>
    %c0_3 = arith.constant 0 : index
    %c0_4 = arith.constant 0 : index
    %3 = vector.load %arg4[%c0_3, %c0_4] : memref<4x128xf32, #tpu.memory_space<vmem>>, vector<4x128xf32>
    %cst_5 = arith.constant 5.000000e-01 : f32
    %4 = vector.broadcast %cst_5 : f32 to vector<4x128xf32>
    %5 = arith.cmpf ogt, %3, %4 : vector<4x128xf32>
    %c0_6 = arith.constant 0 : index
    %6 = memref.load %arg0[%c0_6] : memref<4xf32, #tpu.memory_space<smem>>
    %7 = vector.broadcast %6 : f32 to vector<1x128xf32>
    %8 = arith.subf %2, %7 : vector<1x128xf32>
    %9 = math.absf %8 : vector<1x128xf32>
    %c0_7 = arith.constant 0 : index
    %10 = memref.load %arg1[%c0_7] : memref<4xf32, #tpu.memory_space<smem>>
    %11 = vector.broadcast %10 : f32 to vector<1x128xf32>
    %12 = arith.cmpf ole, %9, %11 : vector<1x128xf32>
    %13 = vector.extract_strided_slice %5 {offsets = [0, 0], sizes = [1, 128], strides = [1, 1]} : vector<4x128xi1> to vector<1x128xi1>
    %14 = arith.xori %12, %13 : vector<1x128xi1>
    %c1 = arith.constant 1 : index
    %15 = memref.load %arg0[%c1] : memref<4xf32, #tpu.memory_space<smem>>
    %16 = vector.broadcast %15 : f32 to vector<1x128xf32>
    %17 = arith.subf %2, %16 : vector<1x128xf32>
    %18 = math.absf %17 : vector<1x128xf32>
    %c1_8 = arith.constant 1 : index
    %19 = memref.load %arg1[%c1_8] : memref<4xf32, #tpu.memory_space<smem>>
    %20 = vector.broadcast %19 : f32 to vector<1x128xf32>
    %21 = arith.cmpf ole, %18, %20 : vector<1x128xf32>
    %22 = vector.extract_strided_slice %5 {offsets = [1, 0], sizes = [1, 128], strides = [1, 1]} : vector<4x128xi1> to vector<1x128xi1>
    %23 = arith.xori %21, %22 : vector<1x128xi1>
    %24 = arith.ori %14, %23 : vector<1x128xi1>
    %c2 = arith.constant 2 : index
    %25 = memref.load %arg0[%c2] : memref<4xf32, #tpu.memory_space<smem>>
    %26 = vector.broadcast %25 : f32 to vector<1x128xf32>
    %27 = arith.subf %2, %26 : vector<1x128xf32>
    %28 = math.absf %27 : vector<1x128xf32>
    %c2_9 = arith.constant 2 : index
    %29 = memref.load %arg1[%c2_9] : memref<4xf32, #tpu.memory_space<smem>>
    %30 = vector.broadcast %29 : f32 to vector<1x128xf32>
    %31 = arith.cmpf ole, %28, %30 : vector<1x128xf32>
    %32 = vector.extract_strided_slice %5 {offsets = [2, 0], sizes = [1, 128], strides = [1, 1]} : vector<4x128xi1> to vector<1x128xi1>
    %33 = arith.xori %31, %32 : vector<1x128xi1>
    %34 = arith.ori %24, %33 : vector<1x128xi1>
    %c3 = arith.constant 3 : index
    %35 = memref.load %arg0[%c3] : memref<4xf32, #tpu.memory_space<smem>>
    %36 = vector.broadcast %35 : f32 to vector<1x128xf32>
    %37 = arith.subf %2, %36 : vector<1x128xf32>
    %38 = math.absf %37 : vector<1x128xf32>
    %c3_10 = arith.constant 3 : index
    %39 = memref.load %arg1[%c3_10] : memref<4xf32, #tpu.memory_space<smem>>
    %40 = vector.broadcast %39 : f32 to vector<1x128xf32>
    %41 = arith.cmpf ole, %38, %40 : vector<1x128xf32>
    %42 = vector.extract_strided_slice %5 {offsets = [3, 0], sizes = [1, 128], strides = [1, 1]} : vector<4x128xi1> to vector<1x128xi1>
    %43 = arith.xori %41, %42 : vector<1x128xi1>
    %44 = arith.ori %34, %43 : vector<1x128xi1>
    %cst_11 = arith.constant 0.000000e+00 : f32
    %cst_12 = arith.constant 1.000000e+00 : f32
    %45 = vector.broadcast %cst_11 : f32 to vector<1x128xf32>
    %46 = vector.broadcast %cst_12 : f32 to vector<1x128xf32>
    %47 = arith.select %44, %45, %46 : vector<1x128xi1>, vector<1x128xf32>
    %c0_13 = arith.constant 0 : index
    %c0_14 = arith.constant 0 : index
    %48 = vector.load %arg5[%c0_13, %c0_14] : memref<1x128xf32, #tpu.memory_space<vmem>>, vector<1x128xf32>
    tpu.vector_store %arg5[%c0_13, %c0_14], %47 {strides = array<i32>} : memref<1x128xf32, #tpu.memory_space<vmem>>, vector<1x128xf32>,
    return
  }
}

</mosaic_0001>

<llo_original>
// kernel: tpu_custom_call.1
$region0: #{tpu_custom_call.1}
  #allocation0 [shape = 'u32[]', space=smem, size = 0x4, offset = 0x4, fixed_abs, tag = 'smem constant byte address 0x4 - core index']
  #allocation1 [shape = 'u32[144,128]{1,0:T(1,128)}', space=vmem, size = 0x12000, scoped, tag = 'internal scratch']
  %s0 = inlined_call_operand.hbm [shape: f32[4], index: 0, kind: input, shape index: {}]
  %s1 = inlined_call_operand.vmem [shape: f32[4], index: 1, kind: input, shape index: {}]
  %s2 = inlined_call_operand.vmem [shape: f32[1,192], index: 2, kind: input, shape index: {}]
  %s3 = inlined_call_operand.hbm [shape: f32[192,128], index: 3, kind: input, shape index: {}]
  %s4 = inlined_call_operand.vmem [shape: f32[4,128], index: 4, kind: input, shape index: {}]
  %s5 = inlined_call_operand.hbm [shape: f32[1,128], index: 5, kind: output, shape index: {}]
  %s6 = sld [smem:[#allocation0]]
  $region42: #{tpu_custom_call.1} parent=0
    _
  %s8 = ssub.s32 1, %s6
  %s9 = scalar_select 0, %s8, %s6
  $region1: #{tpu_custom_call.1} parent=0
    #allocation2 [shape = 'u8[512]{0}', space=smem, size = 0x200, scoped, tag = 'input window, operand 0, single buffered']
    #allocation3 [shape = 's32[1]{0}', space=sflag, size = 0x4, scoped, tag = 'scoped memory for tpu_custom_call.1']
    #allocation4 [shape = 's32[1]{0}', space=sflag, size = 0x4, scoped, tag = 'scoped memory for tpu_custom_call.1']
    #allocation5 [shape = 's32[1]{0}', space=sflag, size = 0x4, scoped, tag = 'scoped memory for tpu_custom_call.1']
    #allocation6 [shape = 's32[1]{0}', space=sflag, size = 0x4, scoped, tag = 'scoped memory for tpu_custom_call.1']
    #allocation7 [shape = 'u8[512]{0}', space=smem, size = 0x200, scoped, tag = 'input window, operand 1, single buffered']
    #allocation8 [shape = 'u8[98304]{0}', space=vmem, size = 0x18000, scoped, tag = 'input window, operand 3, single buffered']
    #allocation9 [shape = 'u8[512]{0}', space=vmem, size = 0x400, scoped, tag = 'output window, operand 0, single buffered']
    %10 = vsyncpa [#allocation5], 0
    %11 = vsyncpa [#allocation6], 0
    %12 = vsyncpa [#allocation3], 0
    %13 = vsyncpa [#allocation4], 0
    // Predicated region
    $region2: #{tpu_custom_call.1} parent=1 // pred_check
      _
    $region3: #{tpu_custom_call.1} parent=1 // pred_check_branch
      %15 = sbr.rel (0) target = $region5
    $region4: #{tpu_custom_call.1} parent=1 // pred_region
      %s17 = ssub.s32 16, 16
      %18 = vsyncadd [#allocation5], %s17
      %21 = dma.hbm_to_smem %s0, 16, [#allocation2], [#allocation5]
    $region5: #{tpu_custom_call.1} parent=1 // pred_fallthru
      _
    // Predicated region
    $region6: #{tpu_custom_call.1} parent=1 // pred_check
      _
    $region7: #{tpu_custom_call.1} parent=1 // pred_check_branch
      %23 = sbr.rel (0) target = $region9
    $region8: #{tpu_custom_call.1} parent=1 // pred_region
      %s25 = ssub.s32 16, 16
      %26 = vsyncadd [#allocation6], %s25
      %s28 = sshll.u32 %s1, 4
      %s29 = int_to_ptr.vmem [resolvable:$true] %s28
      %31 = dma.vmem_to_smem %s29, 16, [#allocation7], [#allocation6]
    $region9: #{tpu_custom_call.1} parent=1 // pred_fallthru
      _
    // Predicated region
    $region10: #{tpu_custom_call.1} parent=1 // pred_check
      _
    $region11: #{tpu_custom_call.1} parent=1 // pred_check_branch
      %33 = sbr.rel (0) target = $region13
    $region12: #{tpu_custom_call.1} parent=1 // pred_region
      _
    $region13: #{tpu_custom_call.1} parent=1 // pred_fallthru
      _
    // Predicated region
    $region14: #{tpu_custom_call.1} parent=1 // pred_check
      _
    $region15: #{tpu_custom_call.1} parent=1 // pred_check_branch
      %35 = sbr.rel (0) target = $region17
    $region16: #{tpu_custom_call.1} parent=1 // pred_region
      %s37 = ssub.s32 3072, 3072
      %38 = vsyncadd [#allocation3], %s37
      %s39 = sshll.u32 [#allocation8], 4
      %s40 = int_to_ptr.vmem [resolvable:$true] %s39
      %45 = dma.hbm_to_vmem [thread:$0]  %s3, 3072, %s40, [#allocation3], 128, 128, 8
    $region17: #{tpu_custom_call.1} parent=1 // pred_fallthru
      _
    // Predicated region
    $region18: #{tpu_custom_call.1} parent=1 // pred_check
      _
    $region19: #{tpu_custom_call.1} parent=1 // pred_check_branch
      %47 = sbr.rel (0) target = $region21
    $region20: #{tpu_custom_call.1} parent=1 // pred_region
      _
    $region21: #{tpu_custom_call.1} parent=1 // pred_fallthru
      _
    // Predicated region
    $region22: #{tpu_custom_call.1} parent=1 // pred_check
      _
    $region23: #{tpu_custom_call.1} parent=1 // pred_check_branch
      %49 = sbr.rel (0) target = $region25
    $region24: #{tpu_custom_call.1} parent=1 // pred_region
      %50 = dma.done [#allocation5], 16
    $region25: #{tpu_custom_call.1} parent=1 // pred_fallthru
      _
    // Predicated region
    $region26: #{tpu_custom_call.1} parent=1 // pred_check
      _
    $region27: #{tpu_custom_call.1} parent=1 // pred_check_branch
      %52 = sbr.rel (0) target = $region29
    $region28: #{tpu_custom_call.1} parent=1 // pred_region
      %53 = dma.done [#allocation6], 16
    $region29: #{tpu_custom_call.1} parent=1 // pred_fallthru
      _
    // Predicated region
    $region30: #{tpu_custom_call.1} parent=1 // pred_check
      _
    $region31: #{tpu_custom_call.1} parent=1 // pred_check_branch
      %55 = sbr.rel (0) target = $region33
    $region32: #{tpu_custom_call.1} parent=1 // pred_region
      %56 = dma.done [#allocation3], 3072
    $region33: #{tpu_custom_call.1} parent=1 // pred_fallthru
      _
    %57 = sfence
    %v58 = vld [vmem:[%s2] sm:$0x3]
    %v59 = vld [vmem:[#allocation8] sm:$0xff]
    %v60 = vld [vmem:[#allocation8 + $0x8] sm:$0xff]
    %v61 = vld [vmem:[#allocation8 + $0x10] sm:$0xff]
    %v62 = vld [vmem:[#allocation8 + $0x18] sm:$0xff]
    %v63 = vld [vmem:[#allocation8 + $0x20] sm:$0xff]
    %v64 = vld [vmem:[#allocation8 + $0x28] sm:$0xff]
    %v65 = vld [vmem:[#allocation8 + $0x30] sm:$0xff]
    %v66 = vld [vmem:[#allocation8 + $0x38] sm:$0xff]
    %v67 = vld [vmem:[#allocation8 + $0x40] sm:$0xff]
    %v68 = vld [vmem:[#allocation8 + $0x48] sm:$0xff]
    %v69 = vld [vmem:[#allocation8 + $0x50] sm:$0xff]
    %v70 = vld [vmem:[#allocation8 + $0x58] sm:$0xff]
    %v71 = vld [vmem:[#allocation8 + $0x60] sm:$0xff]
    %v72 = vld [vmem:[#allocation8 + $0x68] sm:$0xff]
    %v73 = vld [vmem:[#allocation8 + $0x70] sm:$0xff]
    %v74 = vld [vmem:[#allocation8 + $0x78] sm:$0xff]
    %v75 = vld [vmem:[#allocation8 + $0x80] sm:$0xff]
    %v76 = vld [vmem:[#allocation8 + $0x88] sm:$0xff]
    %v77 = vld [vmem:[#allocation8 + $0x90] sm:$0xff]
    %v78 = vld [vmem:[#allocation8 + $0x98] sm:$0xff]
    %v79 = vld [vmem:[#allocation8 + $0xa0] sm:$0xff]
    %v80 = vld [vmem:[#allocation8 + $0xa8] sm:$0xff]
    %v81 = vld [vmem:[#allocation8 + $0xb0] sm:$0xff]
    %v82 = vld [vmem:[#allocation8 + $0xb8] sm:$0xff]
    %v84 = vlaneseq
    %v85 = vshrl.u32 %v84, 7
    %v86 = vsub.s32 0, %v85
    %v87 = vrot.slane %v58, %v86
    %v88 = vlaneseq
    %v89 = vshrl.u32 %v88, 7
    %v90 = vsub.s32 1, %v89
    %v91 = vrot.slane %v58, %v90
    %vm93 = vcmask 523264
    %v94 = vsel %vm93, %v91, 0
    %96 = vmatprep.subr.mxu0 0.0
    %97 = vmatpush1.msra.mxu0 %v74
    %98 = vmatprep.subr.mxu0 0.0
    %99 = vmatpush1.msra.mxu0 %v73
    %100 = vmatprep.subr.mxu0 0.0
    %101 = vmatpush1.msra.mxu0 %v72
    %102 = vmatprep.subr.mxu0 0.0
    %103 = vmatpush1.msra.mxu0 %v71
    %104 = vmatprep.subr.mxu0 0.0
    %105 = vmatpush1.msra.mxu0 %v70
    %106 = vmatprep.subr.mxu0 0.0
    %107 = vmatpush1.msra.mxu0 %v69
    %108 = vmatprep.subr.mxu0 0.0
    %109 = vmatpush1.msra.mxu0 %v68
    %110 = vmatprep.subr.mxu0 0.0
    %111 = vmatpush1.msra.mxu0 %v67
    %112 = vmatprep.subr.mxu0 0.0
    %113 = vmatpush1.msra.mxu0 %v66
    %114 = vmatprep.subr.mxu0 0.0
    %115 = vmatpush1.msra.mxu0 %v65
    %116 = vmatprep.subr.mxu0 0.0
    %117 = vmatpush1.msra.mxu0 %v64
    %118 = vmatprep.subr.mxu0 0.0
    %119 = vmatpush1.msra.mxu0 %v63
    %120 = vmatprep.subr.mxu0 0.0
    %121 = vmatpush1.msra.mxu0 %v62
    %122 = vmatprep.subr.mxu0 0.0
    %123 = vmatpush1.msra.mxu0 %v61
    %124 = vmatprep.subr.mxu0 0.0
    %125 = vmatpush1.msra.mxu0 %v60
    %126 = vmatprep.subr.mxu0 0.0
    %127 = vmatpush1.msra.mxu0 %v59
    %128 = vmatprep.subr.mxu0 0.0
    %129 = vmatpush2.msra.mxu0 0.0
    %130 = vmatprep.subr.mxu0 0.0
    %131 = vmatpush2.msra.mxu0 0.0
    %132 = vmatprep.subr.mxu0 0.0
    %133 = vmatpush2.msra.mxu0 0.0
    %134 = vmatprep.subr.mxu0 0.0
    %135 = vmatpush2.msra.mxu0 0.0
    %136 = vmatprep.subr.mxu0 0.0
    %137 = vmatpush2.msra.mxu0 0.0
    %138 = vmatprep.subr.mxu0 0.0
    %139 = vmatpush2.msra.mxu0 0.0
    %140 = vmatprep.subr.mxu0 0.0
    %141 = vmatpush2.msra.mxu0 0.0
    %142 = vmatprep.subr.mxu0 0.0
    %143 = vmatpush2.msra.mxu0 0.0
    %144 = vmatprep.subr.mxu0 0.0
    %145 = vmatpush2.msra.mxu0 %v82
    %146 = vmatprep.subr.mxu0 0.0
    %147 = vmatpush2.msra.mxu0 %v81
    %148 = vmatprep.subr.mxu0 0.0
    %149 = vmatpush2.msra.mxu0 %v80
    %150 = vmatprep.subr.mxu0 0.0
    %151 = vmatpush2.msra.mxu0 %v79
    %152 = vmatprep.subr.mxu0 0.0
    %153 = vmatpush2.msra.mxu0 %v78
    %154 = vmatprep.subr.mxu0 0.0
    %155 = vmatpush2.msra.mxu0 %v77
    %156 = vmatprep.subr.mxu0 0.0
    %157 = vmatpush2.msra.mxu0 %v76
    %158 = vmatprep.subr.mxu0 0.0
    %159 = vmatpush2.msra.mxu0 %v75
    %160 = vmatprep.mubr.f32.mxu0 %v94
    %161 = vmatmul.mubr.f32.gmra.mxu0 %v87
    %v162 = vpop.f32.mrf.mxu0
    %v163 = vadd.f32 0.0, %v162
    %v164 = vpop.f32.mrf.mxu0
    %165 = vdwg.mxu0
    %v166 = vld [vmem:[%s4] sm:$0xf]
    %vm167 = vcmp.gt.f32.partialorder %v166, 0.5
    %s168 = sld [smem:[#allocation2]]
    %v169 = vstv %s168
    %v170 = vsub.f32 %v163, %v169
    %v171 = vand.u32 2147483647, %v170
    %s172 = sld [smem:[#allocation7]]
    %v173 = vstv %s172
    %vm174 = vcmp.le.f32.partialorder %v171, %v173
    %vm175 = vmxor %vm174, %vm167
    %s176 = sld [smem:[#allocation2 + $0x1]]
    %v177 = vstv %s176
    %v178 = vsub.f32 %v163, %v177
    %v179 = vand.u32 2147483647, %v178
    %s180 = sld [smem:[#allocation7 + $0x1]]
    %v181 = vstv %s180
    %vm182 = vcmp.le.f32.partialorder %v179, %v181
    %v183 = vsel %vm167, 1, 0
    %v184 = vrot.slane %v183, 1
    %vm185 = vcmp.ne.s32.totalorder %v184, 0
    %vm186 = vmxor %vm182, %vm185
    %vm187 = vmor %vm175, %vm186
    %s188 = sld [smem:[#allocation2 + $0x2]]
    %v189 = vstv %s188
    %v190 = vsub.f32 %v163, %v189
    %v191 = vand.u32 2147483647, %v190
    %s192 = sld [smem:[#allocation7 + $0x2]]
    %v193 = vstv %s192
    %vm194 = vcmp.le.f32.partialorder %v191, %v193
    %v195 = vrot.slane %v183, 2
    %vm196 = vcmp.ne.s32.totalorder %v195, 0
    %vm197 = vmxor %vm194, %vm196
    %vm198 = vmor %vm187, %vm197
    %s199 = sld [smem:[#allocation2 + $0x3]]
    %v200 = vstv %s199
    %v201 = vsub.f32 %v163, %v200
    %v202 = vand.u32 2147483647, %v201
    %s203 = sld [smem:[#allocation7 + $0x3]]
    %v204 = vstv %s203
    %vm205 = vcmp.le.f32.partialorder %v202, %v204
    %v206 = vrot.slane %v183, 3
    %vm207 = vcmp.ne.s32.totalorder %v206, 0
    %vm208 = vmxor %vm205, %vm207
    %vm209 = vmor %vm198, %vm208
    %v210 = vsel %vm209, 0.0, 1.0
    %211 = vst [vmem:[#allocation9] sm:$0x1] %v210
    // Predicated region
    $region34: #{tpu_custom_call.1} parent=1 // pred_check
      _
    $region35: #{tpu_custom_call.1} parent=1 // pred_check_branch
      %213 = sbr.rel (0) target = $region37
    $region36: #{tpu_custom_call.1} parent=1 // pred_region
      %s215 = ssub.s32 16, 16
      %216 = vsyncadd [#allocation4], %s215
      %s218 = sshll.u32 [#allocation9], 4
      %s219 = int_to_ptr.vmem [resolvable:$true] %s218
      %221 = dma.vmem_to_hbm [thread:$0]  %s219, 16, %s5, [#allocation4]
    $region37: #{tpu_custom_call.1} parent=1 // pred_fallthru
      _
    // Predicated region
    $region38: #{tpu_custom_call.1} parent=1 // pred_check
      _
    $region39: #{tpu_custom_call.1} parent=1 // pred_check_branch
      %223 = sbr.rel (0) target = $region41
    $region40: #{tpu_custom_call.1} parent=1 // pred_region
      %224 = dma.done [#allocation4], 16
    $region41: #{tpu_custom_call.1} parent=1 // pred_fallthru
      _
    %225 = vsyncpa [#allocation3], 1
    %226 = vsyncpa [#allocation4], 1
    %227 = vsyncpa [#allocation5], 1
    %228 = vsyncpa [#allocation6], 1

</llo_original>
